<compile_context>
chip_gen: v7x
topology: tpu7x:2x2x1
jax: 0.10.0
libtpu: 0.0.40
codegen_flags: <defaults>
</compile_context>

<pallas_src>
from functools import partial

import jax
import jax.numpy as jnp
from jax.experimental import pallas as pl
from jax.experimental.pallas import tpu as pltpu

LANES = 128
MAX_BLOCK_ROWS = 4096      # 4096 * 128 * 4B = 2 MiB per f32 input block
CHUNK_ROWS = 256           # rows per inner-loop step (32 vregs per f32 operand)


def _wbce_kernel(logit_ref, truth_ref, out_ref, acc_ref, *,
                 n_rows, n_blocks, blocks_per_core, block_rows,
                 chunk_rows, acc_rows, use_mxu_fold):
    c = pl.program_id(0)                      # TensorCore-split axis ("parallel")
    i = pl.program_id(1)                      # per-core block axis ("arbitrary")
    g = c * blocks_per_core + i               # global block index

    @pl.when(i == 0)
    def _():
        acc_ref[...] = jnp.zeros_like(acc_ref)

    n_chunks = block_rows // chunk_rows

    if use_mxu_fold:
        # Striped 0/1 selector: fold_mat[s, k] = (k % 8 == s).  dot(fold_mat, x)
        # sums exactly the same row sets as x.reshape(-1, 8, 128).sum(0), but on
        # the otherwise idle MXU instead of the VALU slot.
        sub = jax.lax.broadcasted_iota(jnp.int32, (8, chunk_rows), 0)
        col = jax.lax.broadcasted_iota(jnp.int32, (8, chunk_rows), 1)
        fold_mat = ((col & 7) == sub).astype(jnp.float32)

        def fold(x):
            return jnp.dot(fold_mat, x, preferred_element_type=jnp.float32)
    elif chunk_rows == acc_rows:
        def fold(x):                           # tiny / odd-sized inputs: no fold
            return x
    else:
        def fold(x):                           # VPU fold (chunk_rows % 8 == 0, small)
            return x.reshape(-1, acc_rows, LANES).sum(axis=0)

    def make_chunk_body(masked):
        def body(k, carry):
            r0 = k * chunk_rows
            if not isinstance(r0, int):
                r0 = pl.multiple_of(r0, chunk_rows)
            logit = logit_ref[pl.ds(r0, chunk_rows), :].astype(jnp.float32)
            truth = truth_ref[pl.ds(r0, chunk_rows), :].astype(jnp.float32)
            if masked:
                # Rows past n_rows (ragged last block) hold garbage.  Sanitize
                # BEFORE the logs: (logit=0, truth=0) yields loss=0 and pos=0,
                # so no post-masking is needed and garbage cannot produce NaN.
                row = jax.lax.broadcasted_iota(jnp.int32, (chunk_rows, LANES), 0)
                valid = (g * block_rows + r0 + row) < n_rows
                logit = jnp.where(valid, logit, 0.0)
                truth = jnp.where(valid, truth, 0.0)
            truth = jnp.clip(truth, 0.0, 1.0)
            # F.binary_cross_entropy clamps the log terms at -100.
            log_p = jnp.maximum(jnp.log(logit), -100.0)
            log_1mp = jnp.maximum(jnp.log(1.0 - logit), -100.0)
            # == -(t*log_p + (1-t)*log_1mp), rewritten with fewer VALU ops.
            loss = truth * (log_1mp - log_p) - log_1mp
            pos = jnp.where(truth > 0.5, 1.0, 0.0)
            acc_ref[0] += fold(loss)           # total loss
            acc_ref[1] += fold(pos * loss)     # positive loss
            acc_ref[2] += fold(pos)            # positive count
            return carry
        return body

    def run(masked):
        body = make_chunk_body(masked)
        if n_chunks == 1:
            body(0, 0)
        else:
            jax.lax.fori_loop(0, n_chunks, body, 0, unroll=min(4, n_chunks))

    @pl.when(g < n_blocks - 1)                 # interior blocks: no mask work
    def _():
        run(False)

    @pl.when(g == n_blocks - 1)                # last real block: masked ragged tail
    def _():
        run(True)
    # Phantom blocks (g >= n_blocks, uneven core split) fall through: no accumulation.

    @pl.when(i == blocks_per_core - 1)         # per-core partial-sum writeback
    def _():
        out_ref[...] = acc_ref[...]


def _partial_sums(logit, truth):
    """Plain-JAX (total_loss, pos_loss, pos_count) partial sums for a tiny tail."""
    logit = logit.astype(jnp.float32)
    truth = jnp.clip(truth.astype(jnp.float32), 0.0, 1.0)
    log_p = jnp.maximum(jnp.log(logit), -100.0)
    log_1mp = jnp.maximum(jnp.log(1.0 - logit), -100.0)
    loss = truth * (log_1mp - log_p) - log_1mp
    pos = (truth > 0.5).astype(jnp.float32)
    return loss.sum(), (pos * loss).sum(), pos.sum()


_KERNEL_LOGIT_DTYPES = (jnp.float32, jnp.bfloat16)
_KERNEL_TRUTH_DTYPES = (jnp.float32, jnp.bfloat16, jnp.int8, jnp.uint8)


def weighted_bce(logit_pixel, truth_pixel, weights=(0.4, 0.6)):
    """Pallas-backed WeightedBCE forward (n_labels == 1)."""
    w_pos, w_neg = float(weights[0]), float(weights[1])
    n = int(logit_pixel.size)

    logit_flat = logit_pixel.reshape(-1)
    truth_flat = truth_pixel.reshape(-1)
    # Stream in native dtype when the kernel supports it (saves HBM bytes on the
    # memory-bound generations); otherwise fall back to f32.
    if logit_flat.dtype not in _KERNEL_LOGIT_DTYPES:
        logit_flat = logit_flat.astype(jnp.float32)
    if truth_flat.dtype not in _KERNEL_TRUTH_DTYPES:
        truth_flat = truth_flat.astype(jnp.float32)

    n_rows = n // LANES
    rem = n - n_rows * LANES

    total_loss = jnp.float32(0.0)
    pos_loss = jnp.float32(0.0)
    pos_cnt = jnp.float32(0.0)

    if n_rows > 0:
        n_main = n_rows * LANES
        if rem:
            main_logit = logit_flat[:n_main].reshape(n_rows, LANES)
            main_truth = truth_flat[:n_main].reshape(n_rows, LANES)
        else:
            main_logit = logit_flat.reshape(n_rows, LANES)
            main_truth = truth_flat.reshape(n_rows, LANES)

        block_rows = MAX_BLOCK_ROWS if n_rows > MAX_BLOCK_ROWS else n_rows
        if block_rows >= CHUNK_ROWS and block_rows % CHUNK_ROWS == 0:
            chunk_rows = CHUNK_ROWS
        else:
            chunk_rows = block_rows               # small inputs: one chunk
        use_mxu_fold = (chunk_rows % LANES == 0)  # keep the MXU contracting dim 128-aligned
        acc_rows = 8 if chunk_rows % 8 == 0 else chunk_rows

        n_blocks = pl.cdiv(n_rows, block_rows)
        n_splits = 2 if n_blocks >= 2 else 1      # use both TensorCores on v7x
        bpc = pl.cdiv(n_blocks, n_splits)         # blocks per core

        def in_map(c, i):
            # Clamp phantom blocks (uneven split) to a valid block index; the
            # kernel skips their accumulation.
            return (jnp.minimum(c * bpc + i, n_blocks - 1), 0)

        kernel = partial(_wbce_kernel,
                         n_rows=n_rows, n_blocks=n_blocks, blocks_per_core=bpc,
                         block_rows=block_rows, chunk_rows=chunk_rows,
                         acc_rows=acc_rows, use_mxu_fold=use_mxu_fold)

        out = pl.pallas_call(
            kernel,
            out_shape=jax.ShapeDtypeStruct((n_splits * 3, acc_rows, LANES), jnp.float32),
            grid_spec=pltpu.PrefetchScalarGridSpec(
                num_scalar_prefetch=0,
                grid=(n_splits, bpc),
                in_specs=[pl.BlockSpec((block_rows, LANES), in_map),
                          pl.BlockSpec((block_rows, LANES), in_map)],
                out_specs=pl.BlockSpec((3, acc_rows, LANES), lambda c, i: (c, 0, 0)),
                scratch_shapes=[pltpu.VMEM((3, acc_rows, LANES), jnp.float32)],
            ),
            compiler_params=pltpu.CompilerParams(
                dimension_semantics=("parallel", "arbitrary"),
                vmem_limit_bytes=32 * 1024 * 1024),
        )(main_logit, main_truth)

        out = out.reshape(n_splits, 3, acc_rows, LANES)
        total_loss = out[:, 0].sum()
        pos_loss = out[:, 1].sum()
        pos_cnt = out[:, 2].sum()

    if rem:
        # <=127 trailing elements: fold in with plain JAX instead of jnp.pad-ing
        # (which would materialize a full HBM copy of both inputs).
        t_tot, t_posl, t_pos = _partial_sums(logit_flat[n_rows * LANES:],
                                             truth_flat[n_rows * LANES:])
        total_loss = total_loss + t_tot
        pos_loss = pos_loss + t_posl
        pos_cnt = pos_cnt + t_pos

    neg_loss = total_loss - pos_loss              # pos/neg partition every element
    neg_cnt = jnp.float32(n) - pos_cnt
    return (w_pos * pos_loss / (pos_cnt + 1e-12)
            + w_neg * neg_loss / (neg_cnt + 1e-12))


class WeightedBCE:
    """Minimal stand-in for the PyTorch module (n_labels == 1 path)."""

    def __init__(self, weights=(0.4, 0.6), n_labels=1):
        assert n_labels == 1  # TODO(synk): n_labels != 1 has no defined forward in the reference
        self.weights = tuple(weights)

    def __call__(self, logit_pixel, truth_pixel):
        return weighted_bce(logit_pixel, truth_pixel, self.weights)


def _weighted_bce_ref(logit_pixel, truth_pixel, weights=(0.4, 0.6)):
    logit = logit_pixel.reshape(-1).astype(jnp.float32)
    truth = jnp.clip(truth_pixel.reshape(-1).astype(jnp.float32), 0.0, 1.0)
    loss = -(truth * jnp.maximum(jnp.log(logit), -100.0)
             + (1.0 - truth) * jnp.maximum(jnp.log(1.0 - logit), -100.0))
    pos = (truth > 0.5).astype(jnp.float32)
    neg = (truth <= 0.5).astype(jnp.float32)
    return (weights[0] * pos * loss / (pos.sum() + 1e-12)
            + weights[1] * neg * loss / (neg.sum() + 1e-12)).sum()


if __name__ == "__main__":
    key = jax.random.PRNGKey(0)
    k1, k2, k3, k4, k5, k6 = jax.random.split(key, 6)

    # Primary small example: NCHW, single label channel (n_labels == 1).
    shape = (2, 1, 16, 16)
    logit = jax.nn.sigmoid(jax.random.normal(k1, shape, dtype=jnp.float32))
    truth = (jax.random.uniform(k2, shape) > 0.5).astype(jnp.float32)
    out = jax.block_until_ready(WeightedBCE((0.4, 0.6))(logit, truth))
    ref = _weighted_bce_ref(logit, truth, (0.4, 0.6))
    assert jnp.allclose(out, ref, rtol=1e-5, atol=1e-5), (out, ref)

    # Non-lane-aligned flat size: exercises the plain-JAX tail path.
    shape2 = (3, 1, 9, 7)                        # 189 elements
    logit2 = jax.nn.sigmoid(jax.random.normal(k3, shape2, dtype=jnp.float32))
    truth2 = (jax.random.uniform(k4, shape2) > 0.3).astype(jnp.float32)
    out2 = jax.block_until_ready(weighted_bce(logit2, truth2, (0.4, 0.6)))
    ref2 = _weighted_bce_ref(logit2, truth2, (0.4, 0.6))
    assert jnp.allclose(out2, ref2, rtol=1e-5, atol=1e-5), (out2, ref2)

    # Multi-block size: exercises the chunked loop, the MXU fold, the 2-core
    # grid split and the masked ragged last block.
    shape3 = (2, 1, 640, 512)                    # 655360 elements = 5120 lane rows
    logit3 = jax.nn.sigmoid(jax.random.normal(k5, shape3, dtype=jnp.float32))
    truth3 = (jax.random.uniform(k6, shape3) > 0.5).astype(jnp.float32)
    out3 = jax.block_until_ready(weighted_bce(logit3, truth3, (0.4, 0.6)))
    ref3 = _weighted_bce_ref(logit3, truth3, (0.4, 0.6))
    assert jnp.allclose(out3, ref3, rtol=1e-4, atol=1e-5), (out3, ref3)

    print("KERNEL_OK")
</pallas_src>

<mosaic_0001>
module attributes {stable_mosaic.version = 11 : i64} {
  func.func @_wbce_kernel(%arg0: i32, %arg1: i32, %arg2: memref<4x128xf32, #tpu.memory_space<vmem>>, %arg3: memref<4x128xf32, #tpu.memory_space<vmem>>, %arg4: memref<3x4x128xf32, #tpu.memory_space<vmem>>, %arg5: memref<3x4x128xf32, #tpu.memory_space<vmem>>) attributes {dimension_semantics = [#tpu.dimension_semantics<parallel>, #tpu.dimension_semantics<arbitrary>], iteration_bounds = array<i64: 1, 1>, scalar_prefetch = 0 : i64, scratch_operands = 1 : i64, tpu.core_type = #tpu.core_type<tc>, window_params = [{transform_indices = @transform_0, window_bounds = array<i64: 4, 128>}, {transform_indices = @transform_1, window_bounds = array<i64: 4, 128>}, {transform_indices = @transform_2, window_bounds = array<i64: 3, 4, 128>}]} {
    %c1_i32 = arith.constant 1 : i32
    %0 = arith.muli %arg0, %c1_i32 : i32
    %1 = arith.addi %0, %arg1 : i32
    %c0_i32 = arith.constant 0 : i32
    %2 = arith.cmpi eq, %arg1, %c0_i32 : i32
    %3 = arith.extui %2 : i1 to i32
    %c0_i32_0 = arith.constant 0 : i32
    %4 = arith.cmpi ne, %3, %c0_i32_0 : i32
    scf.if %4 {
      %cst = arith.constant 0.000000e+00 : f32
      %14 = vector.broadcast %cst : f32 to vector<3x4x128xf32>
      %c0 = arith.constant 0 : index
      %c0_7 = arith.constant 0 : index
      %c0_8 = arith.constant 0 : index
      %15 = vector.load %arg5[%c0, %c0_7, %c0_8] : memref<3x4x128xf32, #tpu.memory_space<vmem>>, vector<3x4x128xf32>
      tpu.vector_store %arg5[%c0, %c0_7, %c0_8], %14 {strides = array<i32>} : memref<3x4x128xf32, #tpu.memory_space<vmem>>, vector<3x4x128xf32>,
    } else {
    }
    %c0_i32_1 = arith.constant 0 : i32
    %5 = arith.cmpi slt, %1, %c0_i32_1 : i32
    %6 = arith.extui %5 : i1 to i32
    %c0_i32_2 = arith.constant 0 : i32
    %7 = arith.cmpi ne, %6, %c0_i32_2 : i32
    scf.if %7 {
      %c0 = arith.constant 0 : index
      %c0_7 = arith.constant 0 : index
      %14 = vector.load %arg2[%c0, %c0_7] : memref<4x128xf32, #tpu.memory_space<vmem>>, vector<4x128xf32>
      %c0_8 = arith.constant 0 : index
      %c0_9 = arith.constant 0 : index
      %15 = vector.load %arg3[%c0_8, %c0_9] : memref<4x128xf32, #tpu.memory_space<vmem>>, vector<4x128xf32>
      %cst = arith.constant 0.000000e+00 : f32
      %cst_10 = arith.constant 1.000000e+00 : f32
      %16 = vector.broadcast %cst : f32 to vector<4x128xf32>
      %17 = arith.maximumf %16, %15 : vector<4x128xf32>
      %18 = vector.broadcast %cst_10 : f32 to vector<4x128xf32>
      %19 = arith.minimumf %18, %17 : vector<4x128xf32>
      %20 = math.log %14 : vector<4x128xf32>
      %cst_11 = arith.constant -1.000000e+02 : f32
      %21 = vector.broadcast %cst_11 : f32 to vector<4x128xf32>
      %22 = arith.maximumf %20, %21 : vector<4x128xf32>
      %cst_12 = arith.constant 1.000000e+00 : f32
      %23 = vector.broadcast %cst_12 : f32 to vector<4x128xf32>
      %24 = arith.subf %23, %14 : vector<4x128xf32>
      %25 = math.log %24 : vector<4x128xf32>
      %cst_13 = arith.constant -1.000000e+02 : f32
      %26 = vector.broadcast %cst_13 : f32 to vector<4x128xf32>
      %27 = arith.maximumf %25, %26 : vector<4x128xf32>
      %28 = arith.subf %27, %22 : vector<4x128xf32>
      %29 = arith.mulf %19, %28 : vector<4x128xf32>
      %30 = arith.subf %29, %27 : vector<4x128xf32>
      %cst_14 = arith.constant 5.000000e-01 : f32
      %31 = vector.broadcast %cst_14 : f32 to vector<4x128xf32>
      %32 = arith.cmpf ogt, %19, %31 : vector<4x128xf32>
      %cst_15 = arith.constant 1.000000e+00 : f32
      %cst_16 = arith.constant 0.000000e+00 : f32
      %33 = vector.broadcast %cst_15 : f32 to vector<4x128xf32>
      %34 = vector.broadcast %cst_16 : f32 to vector<4x128xf32>
      %35 = arith.select %32, %33, %34 : vector<4x128xi1>, vector<4x128xf32>
      %c0_17 = arith.constant 0 : index
      %c0_18 = arith.constant 0 : index
      %c0_19 = arith.constant 0 : index
      %36 = vector.load %arg5[%c0_17, %c0_18, %c0_19] : memref<3x4x128xf32, #tpu.memory_space<vmem>>, vector<1x4x128xf32>
      %37 = vector.shape_cast %36 : vector<1x4x128xf32> to vector<4x128xf32>
      %38 = arith.addf %37, %30 : vector<4x128xf32>
      %c0_20 = arith.constant 0 : index
      %c0_21 = arith.constant 0 : index
      %c0_22 = arith.constant 0 : index
      %39 = vector.load %arg5[%c0_20, %c0_21, %c0_22] : memref<3x4x128xf32, #tpu.memory_space<vmem>>, vector<1x4x128xf32>
      %40 = vector.shape_cast %39 : vector<1x4x128xf32> to vector<4x128xf32>
      %41 = vector.shape_cast %38 : vector<4x128xf32> to vector<1x4x128xf32>
      tpu.vector_store %arg5[%c0_20, %c0_21, %c0_22], %41 {strides = array<i32>} : memref<3x4x128xf32, #tpu.memory_space<vmem>>, vector<1x4x128xf32>,
      %c1 = arith.constant 1 : index
      %c0_23 = arith.constant 0 : index
      %c0_24 = arith.constant 0 : index
      %42 = vector.load %arg5[%c1, %c0_23, %c0_24] : memref<3x4x128xf32, #tpu.memory_space<vmem>>, vector<1x4x128xf32>
      %43 = vector.shape_cast %42 : vector<1x4x128xf32> to vector<4x128xf32>
      %44 = arith.mulf %35, %30 : vector<4x128xf32>
      %45 = arith.addf %43, %44 : vector<4x128xf32>
      %c1_25 = arith.constant 1 : index
      %c0_26 = arith.constant 0 : index
      %c0_27 = arith.constant 0 : index
      %46 = vector.load %arg5[%c1_25, %c0_26, %c0_27] : memref<3x4x128xf32, #tpu.memory_space<vmem>>, vector<1x4x128xf32>
      %47 = vector.shape_cast %46 : vector<1x4x128xf32> to vector<4x128xf32>
      %48 = vector.shape_cast %45 : vector<4x128xf32> to vector<1x4x128xf32>
      tpu.vector_store %arg5[%c1_25, %c0_26, %c0_27], %48 {strides = array<i32>} : memref<3x4x128xf32, #tpu.memory_space<vmem>>, vector<1x4x128xf32>,
      %c2 = arith.constant 2 : index
      %c0_28 = arith.constant 0 : index
      %c0_29 = arith.constant 0 : index
      %49 = vector.load %arg5[%c2, %c0_28, %c0_29] : memref<3x4x128xf32, #tpu.memory_space<vmem>>, vector<1x4x128xf32>
      %50 = vector.shape_cast %49 : vector<1x4x128xf32> to vector<4x128xf32>
      %51 = arith.addf %50, %35 : vector<4x128xf32>
      %c2_30 = arith.constant 2 : index
      %c0_31 = arith.constant 0 : index
      %c0_32 = arith.constant 0 : index
      %52 = vector.load %arg5[%c2_30, %c0_31, %c0_32] : memref<3x4x128xf32, #tpu.memory_space<vmem>>, vector<1x4x128xf32>
      %53 = vector.shape_cast %52 : vector<1x4x128xf32> to vector<4x128xf32>
      %54 = vector.shape_cast %51 : vector<4x128xf32> to vector<1x4x128xf32>
      tpu.vector_store %arg5[%c2_30, %c0_31, %c0_32], %54 {strides = array<i32>} : memref<3x4x128xf32, #tpu.memory_space<vmem>>, vector<1x4x128xf32>,
    } else {
    }
    %c0_i32_3 = arith.constant 0 : i32
    %8 = arith.cmpi eq, %1, %c0_i32_3 : i32
    %9 = arith.extui %8 : i1 to i32
    %c0_i32_4 = arith.constant 0 : i32
    %10 = arith.cmpi ne, %9, %c0_i32_4 : i32
    scf.if %10 {
      %c0 = arith.constant 0 : index
      %c0_7 = arith.constant 0 : index
      %14 = vector.load %arg2[%c0, %c0_7] : memref<4x128xf32, #tpu.memory_space<vmem>>, vector<4x128xf32>
      %c0_8 = arith.constant 0 : index
      %c0_9 = arith.constant 0 : index
      %15 = vector.load %arg3[%c0_8, %c0_9] : memref<4x128xf32, #tpu.memory_space<vmem>>, vector<4x128xf32>
      %16 = tpu.iota {dimensions = array<i32: 0>} : vector<4x128xi32>
      %c4_i32 = arith.constant 4 : i32
      %17 = arith.muli %1, %c4_i32 : i32
      %c0_i32_10 = arith.constant 0 : i32
      %18 = arith.addi %17, %c0_i32_10 : i32
      %19 = vector.broadcast %18 : i32 to vector<4x128xi32>
      %20 = arith.addi %19, %16 : vector<4x128xi32>
      %c4_i32_11 = arith.constant 4 : i32
      %21 = vector.broadcast %c4_i32_11 : i32 to vector<4x128xi32>
      %22 = arith.cmpi slt, %20, %21 : vector<4x128xi32>
      %cst = arith.constant 0.000000e+00 : f32
      %23 = vector.broadcast %cst : f32 to vector<4x128xf32>
      %24 = arith.select %22, %14, %23 : vector<4x128xi1>, vector<4x128xf32>
      %cst_12 = arith.constant 0.000000e+00 : f32
      %25 = vector.broadcast %cst_12 : f32 to vector<4x128xf32>
      %26 = arith.select %22, %15, %25 : vector<4x128xi1>, vector<4x128xf32>
      %cst_13 = arith.constant 0.000000e+00 : f32
      %cst_14 = arith.constant 1.000000e+00 : f32
      %27 = vector.broadcast %cst_13 : f32 to vector<4x128xf32>
      %28 = arith.maximumf %27, %26 : vector<4x128xf32>
      %29 = vector.broadcast %cst_14 : f32 to vector<4x128xf32>
      %30 = arith.minimumf %29, %28 : vector<4x128xf32>
      %31 = math.log %24 : vector<4x128xf32>
      %cst_15 = arith.constant -1.000000e+02 : f32
      %32 = vector.broadcast %cst_15 : f32 to vector<4x128xf32>
      %33 = arith.maximumf %31, %32 : vector<4x128xf32>
      %cst_16 = arith.constant 1.000000e+00 : f32
      %34 = vector.broadcast %cst_16 : f32 to vector<4x128xf32>
      %35 = arith.subf %34, %24 : vector<4x128xf32>
      %36 = math.log %35 : vector<4x128xf32>
      %cst_17 = arith.constant -1.000000e+02 : f32
      %37 = vector.broadcast %cst_17 : f32 to vector<4x128xf32>
      %38 = arith.maximumf %36, %37 : vector<4x128xf32>
      %39 = arith.subf %38, %33 : vector<4x128xf32>
      %40 = arith.mulf %30, %39 : vector<4x128xf32>
      %41 = arith.subf %40, %38 : vector<4x128xf32>
      %cst_18 = arith.constant 5.000000e-01 : f32
      %42 = vector.broadcast %cst_18 : f32 to vector<4x128xf32>
      %43 = arith.cmpf ogt, %30, %42 : vector<4x128xf32>
      %cst_19 = arith.constant 1.000000e+00 : f32
      %cst_20 = arith.constant 0.000000e+00 : f32
      %44 = vector.broadcast %cst_19 : f32 to vector<4x128xf32>
      %45 = vector.broadcast %cst_20 : f32 to vector<4x128xf32>
      %46 = arith.select %43, %44, %45 : vector<4x128xi1>, vector<4x128xf32>
      %c0_21 = arith.constant 0 : index
      %c0_22 = arith.constant 0 : index
      %c0_23 = arith.constant 0 : index
      %47 = vector.load %arg5[%c0_21, %c0_22, %c0_23] : memref<3x4x128xf32, #tpu.memory_space<vmem>>, vector<1x4x128xf32>
      %48 = vector.shape_cast %47 : vector<1x4x128xf32> to vector<4x128xf32>
      %49 = arith.addf %48, %41 : vector<4x128xf32>
      %c0_24 = arith.constant 0 : index
      %c0_25 = arith.constant 0 : index
      %c0_26 = arith.constant 0 : index
      %50 = vector.load %arg5[%c0_24, %c0_25, %c0_26] : memref<3x4x128xf32, #tpu.memory_space<vmem>>, vector<1x4x128xf32>
      %51 = vector.shape_cast %50 : vector<1x4x128xf32> to vector<4x128xf32>
      %52 = vector.shape_cast %49 : vector<4x128xf32> to vector<1x4x128xf32>
      tpu.vector_store %arg5[%c0_24, %c0_25, %c0_26], %52 {strides = array<i32>} : memref<3x4x128xf32, #tpu.memory_space<vmem>>, vector<1x4x128xf32>,
      %c1 = arith.constant 1 : index
      %c0_27 = arith.constant 0 : index
      %c0_28 = arith.constant 0 : index
      %53 = vector.load %arg5[%c1, %c0_27, %c0_28] : memref<3x4x128xf32, #tpu.memory_space<vmem>>, vector<1x4x128xf32>
      %54 = vector.shape_cast %53 : vector<1x4x128xf32> to vector<4x128xf32>
      %55 = arith.mulf %46, %41 : vector<4x128xf32>
      %56 = arith.addf %54, %55 : vector<4x128xf32>
      %c1_29 = arith.constant 1 : index
      %c0_30 = arith.constant 0 : index
      %c0_31 = arith.constant 0 : index
      %57 = vector.load %arg5[%c1_29, %c0_30, %c0_31] : memref<3x4x128xf32, #tpu.memory_space<vmem>>, vector<1x4x128xf32>
      %58 = vector.shape_cast %57 : vector<1x4x128xf32> to vector<4x128xf32>
      %59 = vector.shape_cast %56 : vector<4x128xf32> to vector<1x4x128xf32>
      tpu.vector_store %arg5[%c1_29, %c0_30, %c0_31], %59 {strides = array<i32>} : memref<3x4x128xf32, #tpu.memory_space<vmem>>, vector<1x4x128xf32>,
      %c2 = arith.constant 2 : index
      %c0_32 = arith.constant 0 : index
      %c0_33 = arith.constant 0 : index
      %60 = vector.load %arg5[%c2, %c0_32, %c0_33] : memref<3x4x128xf32, #tpu.memory_space<vmem>>, vector<1x4x128xf32>
      %61 = vector.shape_cast %60 : vector<1x4x128xf32> to vector<4x128xf32>
      %62 = arith.addf %61, %46 : vector<4x128xf32>
      %c2_34 = arith.constant 2 : index
      %c0_35 = arith.constant 0 : index
      %c0_36 = arith.constant 0 : index
      %63 = vector.load %arg5[%c2_34, %c0_35, %c0_36] : memref<3x4x128xf32, #tpu.memory_space<vmem>>, vector<1x4x128xf32>
      %64 = vector.shape_cast %63 : vector<1x4x128xf32> to vector<4x128xf32>
      %65 = vector.shape_cast %62 : vector<4x128xf32> to vector<1x4x128xf32>
      tpu.vector_store %arg5[%c2_34, %c0_35, %c0_36], %65 {strides = array<i32>} : memref<3x4x128xf32, #tpu.memory_space<vmem>>, vector<1x4x128xf32>,
    } else {
    }
    %c0_i32_5 = arith.constant 0 : i32
    %11 = arith.cmpi eq, %arg1, %c0_i32_5 : i32
    %12 = arith.extui %11 : i1 to i32
    %c0_i32_6 = arith.constant 0 : i32
    %13 = arith.cmpi ne, %12, %c0_i32_6 : i32
    scf.if %13 {
      %c0 = arith.constant 0 : index
      %c0_7 = arith.constant 0 : index
      %c0_8 = arith.constant 0 : index
      %14 = vector.load %arg5[%c0, %c0_7, %c0_8] : memref<3x4x128xf32, #tpu.memory_space<vmem>>, vector<3x4x128xf32>
      %c0_9 = arith.constant 0 : index
      %c0_10 = arith.constant 0 : index
      %c0_11 = arith.constant 0 : index
      %15 = vector.load %arg4[%c0_9, %c0_10, %c0_11] : memref<3x4x128xf32, #tpu.memory_space<vmem>>, vector<3x4x128xf32>
      tpu.vector_store %arg4[%c0_9, %c0_10, %c0_11], %14 {strides = array<i32>} : memref<3x4x128xf32, #tpu.memory_space<vmem>>, vector<3x4x128xf32>,
    } else {
    }
    return
  }
  func.func @transform_0(%arg0: i32, %arg1: i32) -> (i32, i32) {
    %c1_i32 = arith.constant 1 : i32
    %0 = arith.muli %arg0, %c1_i32 : i32
    %1 = arith.addi %0, %arg1 : i32
    %c0_i32 = arith.constant 0 : i32
    %2 = arith.minsi %1, %c0_i32 : i32
    %c0_i32_0 = arith.constant 0 : i32
    %c0_i32_1 = arith.constant 0 : i32
    return %2, %c0_i32_0 : i32, i32
  }
  func.func @transform_1(%arg0: i32, %arg1: i32) -> (i32, i32) {
    %c1_i32 = arith.constant 1 : i32
    %0 = arith.muli %arg0, %c1_i32 : i32
    %1 = arith.addi %0, %arg1 : i32
    %c0_i32 = arith.constant 0 : i32
    %2 = arith.minsi %1, %c0_i32 : i32
    %c0_i32_0 = arith.constant 0 : i32
    %c0_i32_1 = arith.constant 0 : i32
    return %2, %c0_i32_0 : i32, i32
  }
  func.func @transform_2(%arg0: i32, %arg1: i32) -> (i32, i32, i32) {
    %c0_i32 = arith.constant 0 : i32
    %c0_i32_0 = arith.constant 0 : i32
    %c0_i32_1 = arith.constant 0 : i32
    return %arg0, %c0_i32, %c0_i32_0 : i32, i32, i32
  }
}

</mosaic_0001>

<llo_original>
// kernel: tpu_custom_call.1
$region0: #{tpu_custom_call.1}
  #allocation0 [shape = 'u32[]', space=smem, size = 0x4, offset = 0x4, fixed_abs, tag = 'smem constant byte address 0x4 - core index']
  #allocation1 [shape = 'u32[144,128]{1,0:T(1,128)}', space=vmem, size = 0x12000, scoped, tag = 'internal scratch']
  #allocation2 [shape = 'f32[3,4,128]{2,1,0:T(4,128)}', space=vmem, size = 0x1800, scoped, tag = 'scratch operand']
  %s0 = inlined_call_operand.hbm [shape: f32[4,128], index: 0, kind: input, shape index: {}]
  %s1 = inlined_call_operand.hbm [shape: f32[4,128], index: 1, kind: input, shape index: {}]
  %s2 = inlined_call_operand.hbm [shape: f32[3,4,128], index: 2, kind: output, shape index: {}]
  %s3 = sld [smem:[#allocation0]]
  $region42: #{tpu_custom_call.1} parent=0
    _
  %s5 = ssub.s32 1, %s3
  %s6 = scalar_select 0, %s5, %s3
  $region1: #{tpu_custom_call.1} parent=0
    #allocation3 [shape = 'u8[2048]{0}', space=vmem, size = 0x800, scoped, tag = 'input window, operand 0, single buffered']
    #allocation4 [shape = 's32[1]{0}', space=sflag, size = 0x4, scoped, tag = 'scoped memory for tpu_custom_call.1']
    #allocation5 [shape = 's32[1]{0}', space=sflag, size = 0x4, scoped, tag = 'scoped memory for tpu_custom_call.1']
    #allocation6 [shape = 'u8[2048]{0}', space=vmem, size = 0x800, scoped, tag = 'input window, operand 1, single buffered']
    #allocation7 [shape = 's32[1]{0}', space=sflag, size = 0x4, scoped, tag = 'scoped memory for tpu_custom_call.1']
    #allocation8 [shape = 'u8[6144]{0}', space=vmem, size = 0x1800, scoped, tag = 'output window, operand 0, single buffered']
    %7 = vsyncpa [#allocation4], 0
    %8 = vsyncpa [#allocation7], 0
    %9 = vsyncpa [#allocation5], 0
    // Predicated region
    $region2: #{tpu_custom_call.1} parent=1 // pred_check
      _
    $region3: #{tpu_custom_call.1} parent=1 // pred_check_branch
      %11 = sbr.rel (0) target = $region5
    $region4: #{tpu_custom_call.1} parent=1 // pred_region
      %s12 = sadd.s32 0, 0
      %p13 = scmp.lt.s32.totalorder %s12, 0
      %s14 = scalar_select %p13, %s12, 0
      %s16 = ssub.s32 64, 64
      %17 = vsyncadd [#allocation4], %s16
      %s18 = smul.addr %s14, 64
      %s19 = scalar_lea.hbm %s0, %s18
      %s21 = sshll.u32 [#allocation3], 4
      %s22 = int_to_ptr.vmem [resolvable:$true] %s21
      %24 = dma.hbm_to_vmem [thread:$0]  %s19, 64, %s22, [#allocation4]
    $region5: #{tpu_custom_call.1} parent=1 // pred_fallthru
      _
    // Predicated region
    $region6: #{tpu_custom_call.1} parent=1 // pred_check
      _
    $region7: #{tpu_custom_call.1} parent=1 // pred_check_branch
      %26 = sbr.rel (0) target = $region9
    $region8: #{tpu_custom_call.1} parent=1 // pred_region
      %s27 = sadd.s32 0, 0
      %p28 = scmp.lt.s32.totalorder %s27, 0
      %s29 = scalar_select %p28, %s27, 0
      %s31 = ssub.s32 64, 64
      %32 = vsyncadd [#allocation7], %s31
      %s33 = smul.addr %s29, 64
      %s34 = scalar_lea.hbm %s1, %s33
      %s36 = sshll.u32 [#allocation6], 4
      %s37 = int_to_ptr.vmem [resolvable:$true] %s36
      %39 = dma.hbm_to_vmem [thread:$0]  %s34, 64, %s37, [#allocation7]
    $region9: #{tpu_custom_call.1} parent=1 // pred_fallthru
      _
    // Predicated region
    $region10: #{tpu_custom_call.1} parent=1 // pred_check
      _
    $region11: #{tpu_custom_call.1} parent=1 // pred_check_branch
      %41 = sbr.rel (0) target = $region13
    $region12: #{tpu_custom_call.1} parent=1 // pred_region
      %42 = dma.done [#allocation4], 64
    $region13: #{tpu_custom_call.1} parent=1 // pred_fallthru
      _
    // Predicated region
    $region14: #{tpu_custom_call.1} parent=1 // pred_check
      _
    $region15: #{tpu_custom_call.1} parent=1 // pred_check_branch
      %44 = sbr.rel (0) target = $region17
    $region16: #{tpu_custom_call.1} parent=1 // pred_region
      %45 = dma.done [#allocation7], 64
    $region17: #{tpu_custom_call.1} parent=1 // pred_fallthru
      _
    %s46 = sadd.s32 0, 0
    %p47 = scmp.lt.s32.totalorder %s46, 0
    %s48 = scalar_select %p47, %s46, 0
    %s49 = sadd.s32 0, 0
    %p50 = scmp.lt.s32.totalorder %s49, 0
    %s51 = scalar_select %p50, %s49, 0
    %s52 = sadd.s32 0, 0
    %p53 = scmp.eq.s32.totalorder 0, 0
    // Predicated region
    $region18: #{tpu_custom_call.1} parent=1 // pred_check
      %p54 = pneg %p53
    $region19: #{tpu_custom_call.1} parent=1 // pred_check_branch
      %56 = sbr.rel (%p54) target = $region21
    $region20: #{tpu_custom_call.1} parent=1 // pred_region
      %57 = vst [vmem:[#allocation2] sm:$0xf] 0.0
      %58 = vst [vmem:[#allocation2 + $0x4] sm:$0xf] 0.0
      %59 = vst [vmem:[#allocation2 + $0x8] sm:$0xf] 0.0
    $region21: #{tpu_custom_call.1} parent=1 // pred_fallthru
      _
    %p60 = scmp.lt.s32.totalorder %s52, 0
    // Predicated region
    $region22: #{tpu_custom_call.1} parent=1 // pred_check
      %p61 = pneg %p60
    $region23: #{tpu_custom_call.1} parent=1 // pred_check_branch
      %63 = sbr.rel (%p61) target = $region25
    $region24: #{tpu_custom_call.1} parent=1 // pred_region
      %v64 = vld [vmem:[#allocation3] sm:$0xf]
      %v65 = vld [vmem:[#allocation6] sm:$0xf]
      %v66 = vmax.f32 %v65, 0.0
      %v67 = vmin.f32 %v66, 1.0
      %v68 = vlog2.pop %v64
      %v69 = vmul.f32 %v68, 0.6931472
      %v70 = vmax.f32 %v69, -100.0
      %v71 = vsub.f32 1.0, %v64
      %v72 = vlog2.pop %v71
      %v73 = vmul.f32 %v72, 0.6931472
      %v74 = vmax.f32 %v73, -100.0
      %v75 = vsub.f32 %v74, %v70
      %v76 = vmul.f32 %v67, %v75
      %v77 = vsub.f32 %v76, %v74
      %vm78 = vcmp.gt.f32.partialorder %v67, 0.5
      %v79 = vsel %vm78, 1.0, 0.0
      %v80 = vld [vmem:[#allocation2] sm:$0xf]
      %v81 = vadd.f32 %v80, %v77
      %82 = vst [vmem:[#allocation2] sm:$0xf] %v81
      %s83 = scalar_lea.vmem [#allocation2], 4
      %v84 = vld [vmem:[%s83] sm:$0xf]
      %v85 = vmul.f32 %v79, %v77
      %v86 = vadd.f32 %v84, %v85
      %87 = vst [vmem:[%s83] sm:$0xf] %v86
      %s88 = scalar_lea.vmem [#allocation2], 8
      %v89 = vld [vmem:[%s88] sm:$0xf]
      %v90 = vadd.f32 %v89, %v79
      %91 = vst [vmem:[%s88] sm:$0xf] %v90
    $region25: #{tpu_custom_call.1} parent=1 // pred_fallthru
      _
    %p92 = scmp.eq.s32.totalorder %s52, 0
    // Predicated region
    $region26: #{tpu_custom_call.1} parent=1 // pred_check
      %p93 = pneg %p92
    $region27: #{tpu_custom_call.1} parent=1 // pred_check_branch
      %95 = sbr.rel (%p93) target = $region29
    $region28: #{tpu_custom_call.1} parent=1 // pred_region
      %v96 = vld [vmem:[#allocation3] sm:$0xf]
      %v97 = vld [vmem:[#allocation6] sm:$0xf]
      %v98 = vlaneseq
      %v99 = vshrl.u32 %v98, 7
      %s100 = smul.u32 %s52, 4
      %v101 = vstv %s100
      %v102 = vadd.s32 %v101, %v99
      %vm103 = vcmp.lt.s32.totalorder %v102, 4
      %v104 = vsel %vm103, %v96, 0.0
      %v105 = vsel %vm103, %v97, 0.0
      %v106 = vmax.f32 %v105, 0.0
      %v107 = vmin.f32 %v106, 1.0
      %v108 = vlog2.pop %v104
      %v109 = vmul.f32 %v108, 0.6931472
      %v110 = vmax.f32 %v109, -100.0
      %v111 = vsub.f32 1.0, %v104
      %v112 = vlog2.pop %v111
      %v113 = vmul.f32 %v112, 0.6931472
      %v114 = vmax.f32 %v113, -100.0
      %v115 = vsub.f32 %v114, %v110
      %v116 = vmul.f32 %v107, %v115
      %v117 = vsub.f32 %v116, %v114
      %vm118 = vcmp.gt.f32.partialorder %v107, 0.5
      %v119 = vsel %vm118, 1.0, 0.0
      %v120 = vld [vmem:[#allocation2] sm:$0xf]
      %v121 = vadd.f32 %v120, %v117
      %122 = vst [vmem:[#allocation2] sm:$0xf] %v121
      %s123 = scalar_lea.vmem [#allocation2], 4
      %v124 = vld [vmem:[%s123] sm:$0xf]
      %v125 = vmul.f32 %v119, %v117
      %v126 = vadd.f32 %v124, %v125
      %127 = vst [vmem:[%s123] sm:$0xf] %v126
      %s128 = scalar_lea.vmem [#allocation2], 8
      %v129 = vld [vmem:[%s128] sm:$0xf]
      %v130 = vadd.f32 %v129, %v119
      %131 = vst [vmem:[%s128] sm:$0xf] %v130
    $region29: #{tpu_custom_call.1} parent=1 // pred_fallthru
      _
    // Predicated region
    $region30: #{tpu_custom_call.1} parent=1 // pred_check
      %p132 = pneg %p53
    $region31: #{tpu_custom_call.1} parent=1 // pred_check_branch
      %134 = sbr.rel (%p132) target = $region33
    $region32: #{tpu_custom_call.1} parent=1 // pred_region
      %v135 = vld [vmem:[#allocation2] sm:$0xf]
      %v136 = vld [vmem:[#allocation2 + $0x4] sm:$0xf]
      %v137 = vld [vmem:[#allocation2 + $0x8] sm:$0xf]
      %138 = vst [vmem:[#allocation8] sm:$0xf] %v135
      %139 = vst [vmem:[#allocation8 + $0x4] sm:$0xf] %v136
      %140 = vst [vmem:[#allocation8 + $0x8] sm:$0xf] %v137
    $region33: #{tpu_custom_call.1} parent=1 // pred_fallthru
      _
    // Predicated region
    $region34: #{tpu_custom_call.1} parent=1 // pred_check
      _
    $region35: #{tpu_custom_call.1} parent=1 // pred_check_branch
      %142 = sbr.rel (0) target = $region37
    $region36: #{tpu_custom_call.1} parent=1 // pred_region
      %s144 = ssub.s32 192, 192
      %145 = vsyncadd [#allocation5], %s144
      %s146 = sshll.u32 [#allocation8], 4
      %s147 = int_to_ptr.vmem [resolvable:$true] %s146
      %152 = dma.vmem_to_hbm [thread:$0]  %s147, 192, %s2, [#allocation5], 64, 64, 4
    $region37: #{tpu_custom_call.1} parent=1 // pred_fallthru
      _
    // Predicated region
    $region38: #{tpu_custom_call.1} parent=1 // pred_check
      _
    $region39: #{tpu_custom_call.1} parent=1 // pred_check_branch
      %154 = sbr.rel (0) target = $region41
    $region40: #{tpu_custom_call.1} parent=1 // pred_region
      %155 = dma.done [#allocation5], 192
    $region41: #{tpu_custom_call.1} parent=1 // pred_fallthru
      _
    %156 = vsyncpa [#allocation4], 1
    %157 = vsyncpa [#allocation7], 1
    %158 = vsyncpa [#allocation5], 1

</llo_original>
